<compile_context>
chip_gen: v7x
topology: tpu7x:2x2x1
jax: 0.10.0
libtpu: 0.0.40
codegen_flags: <defaults>
</compile_context>

<pallas_src>
import jax
import jax.numpy as jnp
from jax.experimental import pallas as pl
from jax.experimental.pallas import tpu as pltpu

SUPERSENSES = ['act', 'animal', 'artifact', 'attribute', 'body', 'cognition',
               'communication', 'event', 'feeling', 'food', 'institution',
               'act*cognition', 'object', 'possession', 'person', 'phenomenon',
               'plant', 'artifact*cognition', 'quantity', 'relation', 'state',
               'substance', 'time', 'groupxperson']
NB_CLASSES = len(SUPERSENSES)   # 24

LANE = 128            # lane width: pad H and C to a multiple of this
SUBLANE_BF16 = 16     # bf16 packs 16 rows per vreg sublane group
NEG_BIG = -1.0e30     # finite "minus infinity" for padded class logits


def _round_up(x, m):
    return ((x + m - 1) // m) * m


# --------------------------------------------------------------------------
# Kernel
# --------------------------------------------------------------------------
def supersense_head_kernel(x_ref, w1_ref, b1_ref, w2_ref, b2_ref, out_ref):
    """x:[TB,E] f32, w1:[E,Hp] bf16, b1:[1,Hp] f32, w2:[Hp,Cp] bf16,
    b2:[1,Cp] f32  ->  out:[TB,Cp] log-probs (padded classes ~ -1e30)."""
    # in-kernel bf16 cast of the streamed x tile (hides under the DMA)
    x = x_ref[...].astype(jnp.bfloat16)                          # [TB, E]

    # linear_1 + ReLU  (MXU bf16, f32 accumulate; bias/relu in f32)
    h = jnp.dot(x, w1_ref[...], preferred_element_type=jnp.float32)
    h = jnp.maximum(h + b1_ref[...], 0.0)                        # [TB, Hp] f32

    # linear_2  (padded b2 lanes are -1e30 -> exp ~ 0 in the LSE)
    logits = jnp.dot(h.astype(jnp.bfloat16), w2_ref[...],
                     preferred_element_type=jnp.float32)
    logits = logits + b2_ref[...]                                # [TB, Cp] f32

    # log_softmax over the class (lane) dimension, numerically stable
    m = jnp.max(logits, axis=-1, keepdims=True)                  # [TB, 1]
    z = logits - m
    lse = jnp.log(jnp.sum(jnp.exp(z), axis=-1, keepdims=True))   # [TB, 1]
    out_ref[...] = (z - lse).astype(out_ref.dtype)               # [TB, Cp]


# --------------------------------------------------------------------------
# One-time parameter preparation (hoisted out of the per-call path)
# --------------------------------------------------------------------------
def prepare_supersense_params(w1, b1, w2, b2):
    """Pad H/C to 128 lanes and cast matmul weights to bf16, once."""
    E, H = w1.shape
    C = w2.shape[1]
    H_pad = max(_round_up(H, LANE), LANE)
    C_pad = max(_round_up(C, LANE), LANE)

    w1_bf = jnp.zeros((E, H_pad), jnp.float32).at[:, :H].set(w1).astype(
        jnp.bfloat16)
    b1_p = jnp.zeros((1, H_pad), jnp.float32).at[:, :H].set(b1.reshape(1, H))
    w2_bf = jnp.zeros((H_pad, C_pad), jnp.float32).at[:H, :C].set(w2).astype(
        jnp.bfloat16)
    b2_p = jnp.full((1, C_pad), NEG_BIG, jnp.float32).at[:, :C].set(
        b2.reshape(1, C))
    return dict(w1=w1_bf, b1=b1_p, w2=w2_bf, b2=b2_p,
                E=E, H=H, C=C, H_pad=H_pad, C_pad=C_pad)


def _choose_batch_tile(B, block_b):
    """Multiple of 16, >= 4 grid steps for large B (v7x megacore), <= block_b."""
    tb = min(block_b, max(SUBLANE_BF16,
                          _round_up(pl.cdiv(B, 4), SUBLANE_BF16)))
    if tb >= B:
        tb = B          # single full block; no partial-block handling needed
    return tb


# --------------------------------------------------------------------------
# Forward
# --------------------------------------------------------------------------
def supersense_head_forward(cls_embeddings, prepared, *, block_b=1024,
                            out_dtype=jnp.bfloat16):
    """Pallas implementation of SupersenseTagger.forward (post-BERT head).

    cls_embeddings: [B, E] float32  (== bert last_hidden_state[:, 0, :])
    prepared:       output of prepare_supersense_params()
    returns:        [B, C_pad] log-probabilities (padded class lanes ~ -1e30;
                    slice [:, :NB_CLASSES] at the final consumer if needed).
    """
    B, E = cls_embeddings.shape
    assert E == prepared["E"]
    H_pad, C_pad = prepared["H_pad"], prepared["C_pad"]
    w1_bf, b1_p, w2_bf, b2_p = (prepared["w1"], prepared["b1"],
                                prepared["w2"], prepared["b2"])

    TB = _choose_batch_tile(B, block_b)
    grid = (pl.cdiv(B, TB),)
    out_itemsize = jnp.dtype(out_dtype).itemsize

    # VMEM budget: double-buffered x / out tiles + resident (double-buffered)
    # weights & biases; clamp to [32 MiB, 64 MiB] (v7x physical cap).
    vmem_budget = (2 * TB * E * 4
                   + 2 * TB * C_pad * out_itemsize
                   + 2 * (E * H_pad * 2 + H_pad * C_pad * 2
                          + H_pad * 4 + C_pad * 4))
    vmem_limit = min(max(int(1.5 * vmem_budget) + (4 << 20), 32 << 20),
                     64 << 20)

    cost = pl.CostEstimate(
        flops=2 * B * (E * H_pad + H_pad * C_pad),
        transcendentals=B * (C_pad + 1),
        bytes_accessed=(4 * B * E                       # x (f32)
                        + out_itemsize * B * C_pad      # out
                        + 2 * (E * H_pad + H_pad * C_pad)   # weights (bf16)
                        + 4 * (H_pad + C_pad)),         # biases (f32)
    )

    return pl.pallas_call(
        supersense_head_kernel,
        out_shape=jax.ShapeDtypeStruct((B, C_pad), out_dtype),
        grid=grid,
        in_specs=[
            pl.BlockSpec((TB, E), lambda i: (i, 0)),         # x: tiled over B
            pl.BlockSpec((E, H_pad), lambda i: (0, 0)),      # w1: resident
            pl.BlockSpec((1, H_pad), lambda i: (0, 0)),      # b1: resident
            pl.BlockSpec((H_pad, C_pad), lambda i: (0, 0)),  # w2: resident
            pl.BlockSpec((1, C_pad), lambda i: (0, 0)),      # b2: resident
        ],
        out_specs=pl.BlockSpec((TB, C_pad), lambda i: (i, 0)),
        compiler_params=pltpu.CompilerParams(
            dimension_semantics=("parallel",),
            vmem_limit_bytes=vmem_limit),
        cost_estimate=cost,
    )(cls_embeddings, w1_bf, b1_p, w2_bf, b2_p)


def supersense_tagger_forward(cls_embeddings, w1, b1, w2, b2, **kwargs):
    """Convenience wrapper (prepare params per call; hoist in real use)."""
    prepared = prepare_supersense_params(w1, b1, w2, b2)
    return supersense_head_forward(cls_embeddings, prepared, **kwargs)


def predict_supersenses(cls_embeddings, prepared, **kwargs):
    """predict() equivalent: argmax directly on the padded log-probs
    (padded lanes are ~ -1e30, never selected)."""
    log_probs = supersense_head_forward(cls_embeddings, prepared, **kwargs)
    idx = jnp.argmax(log_probs, axis=1)
    return [SUPERSENSES[int(i)] for i in idx]


# --------------------------------------------------------------------------
# Reference & test
# --------------------------------------------------------------------------
def reference_forward(cls_embeddings, w1, b1, w2, b2):
    h = jnp.maximum(cls_embeddings @ w1 + b1, 0.0)
    logits = h @ w2 + b2
    return jax.nn.log_softmax(logits, axis=1)


def _make_params(key, E, H, C):
    k_w1, k_b1, k_w2, k_b2 = jax.random.split(key, 4)
    w1 = jax.random.uniform(k_w1, (E, H), jnp.float32,
                            minval=-1.0 / jnp.sqrt(E), maxval=1.0 / jnp.sqrt(E))
    b1 = jax.random.uniform(k_b1, (H,), jnp.float32,
                            minval=-1.0 / jnp.sqrt(E), maxval=1.0 / jnp.sqrt(E))
    w2 = jax.random.uniform(k_w2, (H, C), jnp.float32,
                            minval=-1.0 / jnp.sqrt(H), maxval=1.0 / jnp.sqrt(H))
    b2 = jax.random.uniform(k_b2, (C,), jnp.float32,
                            minval=-1.0 / jnp.sqrt(H), maxval=1.0 / jnp.sqrt(H))
    return w1, b1, w2, b2


if __name__ == "__main__":
    key = jax.random.PRNGKey(0)
    k_small, k_big, k_params = jax.random.split(key, 3)

    # --- small shapes consistent with the module --------------------------
    #   embedding_layer_size (bert hidden) -> 32, hidden_layer_size -> 64,
    #   output_size -> NB_CLASSES (24), batch -> 8.
    B, E, H, C = 8, 32, 64, NB_CLASSES
    x = jax.random.normal(k_small, (B, E), dtype=jnp.float32)
    w1, b1, w2, b2 = _make_params(k_params, E, H, C)

    prepared = prepare_supersense_params(w1, b1, w2, b2)   # hoisted, once
    log_probs_padded = supersense_head_forward(x, prepared)
    log_probs_padded = jax.block_until_ready(log_probs_padded)
    assert log_probs_padded.shape == (B, prepared["C_pad"])

    # final consumer slices to the real classes
    log_probs = log_probs_padded[:, :C].astype(jnp.float32)
    ref = reference_forward(x, w1, b1, w2, b2)
    # bf16 matmul operands + bf16 output -> loosened tolerance vs f32 reference
    assert jnp.allclose(log_probs, ref, atol=5e-2, rtol=5e-2)
    # rows must be valid log-probability distributions (bf16 output slack)
    assert jnp.allclose(jnp.sum(jnp.exp(log_probs), axis=1),
                        jnp.ones((B,)), atol=2e-2)

    # predict() equivalent on the padded output (no slice needed)
    labels = predict_supersenses(x, prepared)
    assert len(labels) == B and all(l in SUPERSENSES for l in labels)

    # --- second check: batch not a multiple of the tile, grid > 1 ---------
    B2, E2 = 300, 256
    x2 = jax.random.normal(k_big, (B2, E2), dtype=jnp.float32)
    w1b, b1b, w2b, b2b = _make_params(k_params, E2, H, C)
    prep2 = prepare_supersense_params(w1b, b1b, w2b, b2b)
    lp2_padded = supersense_head_forward(x2, prep2, block_b=128)
    lp2_padded = jax.block_until_ready(lp2_padded)
    assert lp2_padded.shape == (B2, prep2["C_pad"])
    lp2 = lp2_padded[:, :C].astype(jnp.float32)
    ref2 = reference_forward(x2, w1b, b1b, w2b, b2b)
    assert jnp.allclose(lp2, ref2, atol=5e-2, rtol=5e-2)
    assert jnp.allclose(jnp.sum(jnp.exp(lp2), axis=1),
                        jnp.ones((B2,)), atol=2e-2)

    print("KERNEL_OK")
</pallas_src>

<mosaic_0001>
module attributes {stable_mosaic.version = 11 : i64} {
  func.func @supersense_head_kernel(%arg0: i32, %arg1: memref<8x32xf32, #tpu.memory_space<vmem>>, %arg2: memref<32x128xbf16, #tpu.memory_space<vmem>>, %arg3: memref<1x128xf32, #tpu.memory_space<vmem>>, %arg4: memref<128x128xbf16, #tpu.memory_space<vmem>>, %arg5: memref<1x128xf32, #tpu.memory_space<vmem>>, %arg6: memref<8x128xbf16, #tpu.memory_space<vmem>>) attributes {dimension_semantics = [#tpu.dimension_semantics<parallel>], iteration_bounds = array<i64: 1>, scalar_prefetch = 0 : i64, scratch_operands = 0 : i64, tpu.core_type = #tpu.core_type<tc>, window_params = [{transform_indices = @transform_0, window_bounds = array<i64: 8, 32>}, {pipeline_mode = #tpu.pipeline_mode<synchronous>, transform_indices = @transform_1, window_bounds = array<i64: 32, 128>}, {pipeline_mode = #tpu.pipeline_mode<synchronous>, transform_indices = @transform_2, window_bounds = array<i64: 1, 128>}, {pipeline_mode = #tpu.pipeline_mode<synchronous>, transform_indices = @transform_3, window_bounds = array<i64: 128, 128>}, {pipeline_mode = #tpu.pipeline_mode<synchronous>, transform_indices = @transform_4, window_bounds = array<i64: 1, 128>}, {transform_indices = @transform_5, window_bounds = array<i64: 8, 128>}]} {
    %c0 = arith.constant 0 : index
    %c0_0 = arith.constant 0 : index
    %0 = vector.load %arg1[%c0, %c0_0] : memref<8x32xf32, #tpu.memory_space<vmem>>, vector<8x32xf32>
    %1 = arith.truncf %0 : vector<8x32xf32> to vector<8x32xbf16>
    %c0_1 = arith.constant 0 : index
    %c0_2 = arith.constant 0 : index
    %2 = vector.load %arg2[%c0_1, %c0_2] : memref<32x128xbf16, #tpu.memory_space<vmem>>, vector<32x128xbf16>
    %cst = arith.constant dense<0.000000e+00> : vector<8x128xf32>
    %3 = tpu.matmul %1, %2, %cst {dimension_numbers = #tpu.dot_dimension_numbers<[1], [0], [0], [1], [0, 0, 1, 1], [], []>} : vector<8x32xbf16>, vector<32x128xbf16>, vector<8x128xf32> -> vector<8x128xf32>
    %c0_3 = arith.constant 0 : index
    %c0_4 = arith.constant 0 : index
    %4 = vector.load %arg3[%c0_3, %c0_4] : memref<1x128xf32, #tpu.memory_space<vmem>>, vector<1x128xf32>
    %5 = vector.broadcast %4 : vector<1x128xf32> to vector<8x128xf32>
    %6 = arith.addf %3, %5 : vector<8x128xf32>
    %cst_5 = arith.constant 0.000000e+00 : f32
    %7 = vector.broadcast %cst_5 : f32 to vector<8x128xf32>
    %8 = arith.maximumf %6, %7 : vector<8x128xf32>
    %9 = arith.truncf %8 : vector<8x128xf32> to vector<8x128xbf16>
    %c0_6 = arith.constant 0 : index
    %c0_7 = arith.constant 0 : index
    %10 = vector.load %arg4[%c0_6, %c0_7] : memref<128x128xbf16, #tpu.memory_space<vmem>>, vector<128x128xbf16>
    %cst_8 = arith.constant dense<0.000000e+00> : vector<8x128xf32>
    %11 = tpu.matmul %9, %10, %cst_8 {dimension_numbers = #tpu.dot_dimension_numbers<[1], [0], [0], [1], [0, 0, 1, 1], [], []>} : vector<8x128xbf16>, vector<128x128xbf16>, vector<8x128xf32> -> vector<8x128xf32>
    %c0_9 = arith.constant 0 : index
    %c0_10 = arith.constant 0 : index
    %12 = vector.load %arg5[%c0_9, %c0_10] : memref<1x128xf32, #tpu.memory_space<vmem>>, vector<1x128xf32>
    %13 = vector.broadcast %12 : vector<1x128xf32> to vector<8x128xf32>
    %14 = arith.addf %11, %13 : vector<8x128xf32>
    %cst_11 = arith.constant dense<0xFF800000> : vector<8xf32>
    %15 = vector.multi_reduction <maximumf>, %14, %cst_11 [1] : vector<8x128xf32> to vector<8xf32>
    %16 = vector.shape_cast %15 : vector<8xf32> to vector<8x1xf32>
    %17 = vector.broadcast %16 : vector<8x1xf32> to vector<8x128xf32>
    %18 = arith.subf %14, %17 : vector<8x128xf32>
    %19 = math.exp %18 : vector<8x128xf32>
    %cst_12 = arith.constant dense<0.000000e+00> : vector<8xf32>
    %20 = vector.multi_reduction <add>, %19, %cst_12 [1] : vector<8x128xf32> to vector<8xf32>
    %21 = vector.shape_cast %20 : vector<8xf32> to vector<8x1xf32>
    %22 = math.log %21 : vector<8x1xf32>
    %23 = vector.broadcast %22 : vector<8x1xf32> to vector<8x128xf32>
    %24 = arith.subf %18, %23 : vector<8x128xf32>
    %25 = arith.truncf %24 : vector<8x128xf32> to vector<8x128xbf16>
    %c0_13 = arith.constant 0 : index
    %c0_14 = arith.constant 0 : index
    %26 = vector.load %arg6[%c0_13, %c0_14] : memref<8x128xbf16, #tpu.memory_space<vmem>>, vector<8x128xbf16>
    tpu.vector_store %arg6[%c0_13, %c0_14], %25 {strides = array<i32>} : memref<8x128xbf16, #tpu.memory_space<vmem>>, vector<8x128xbf16>,
    return
  }
  func.func @transform_0(%arg0: i32) -> (i32, i32) {
    %c0_i32 = arith.constant 0 : i32
    %c0_i32_0 = arith.constant 0 : i32
    return %arg0, %c0_i32 : i32, i32
  }
  func.func @transform_1(%arg0: i32) -> (i32, i32) {
    %c0_i32 = arith.constant 0 : i32
    %c0_i32_0 = arith.constant 0 : i32
    %c0_i32_1 = arith.constant 0 : i32
    return %c0_i32, %c0_i32_0 : i32, i32
  }
  func.func @transform_2(%arg0: i32) -> (i32, i32) {
    %c0_i32 = arith.constant 0 : i32
    %c0_i32_0 = arith.constant 0 : i32
    %c0_i32_1 = arith.constant 0 : i32
    return %c0_i32, %c0_i32_0 : i32, i32
  }
  func.func @transform_3(%arg0: i32) -> (i32, i32) {
    %c0_i32 = arith.constant 0 : i32
    %c0_i32_0 = arith.constant 0 : i32
    %c0_i32_1 = arith.constant 0 : i32
    return %c0_i32, %c0_i32_0 : i32, i32
  }
  func.func @transform_4(%arg0: i32) -> (i32, i32) {
    %c0_i32 = arith.constant 0 : i32
    %c0_i32_0 = arith.constant 0 : i32
    %c0_i32_1 = arith.constant 0 : i32
    return %c0_i32, %c0_i32_0 : i32, i32
  }
  func.func @transform_5(%arg0: i32) -> (i32, i32) {
    %c0_i32 = arith.constant 0 : i32
    %c0_i32_0 = arith.constant 0 : i32
    return %arg0, %c0_i32 : i32, i32
  }
}

</mosaic_0001>

<llo_original>
// kernel: tpu_custom_call.1
$region0: #{tpu_custom_call.1}
  #allocation0 [shape = 'u32[]', space=smem, size = 0x4, offset = 0x4, fixed_abs, tag = 'smem constant byte address 0x4 - core index']
  #allocation1 [shape = 'u32[144,128]{1,0:T(1,128)}', space=vmem, size = 0x12000, scoped, tag = 'internal scratch']
  %s0 = inlined_call_operand.hbm [shape: f32[8,32], index: 0, kind: input, shape index: {}]
  %s1 = inlined_call_operand.hbm [shape: bf16[32,128], index: 1, kind: input, shape index: {}]
  %s2 = inlined_call_operand.vmem [shape: f32[1,128], index: 2, kind: input, shape index: {}]
  %s3 = inlined_call_operand.hbm [shape: bf16[128,128], index: 3, kind: input, shape index: {}]
  %s4 = inlined_call_operand.vmem [shape: f32[1,128], index: 4, kind: input, shape index: {}]
  %s5 = inlined_call_operand.hbm [shape: bf16[8,128], index: 5, kind: output, shape index: {}]
  %s6 = sld [smem:[#allocation0]]
  $region42: #{tpu_custom_call.1} parent=0
    _
  %s8 = ssub.s32 1, %s6
  %s9 = scalar_select 0, %s8, %s6
  $region1: #{tpu_custom_call.1} parent=0
    #allocation2 [shape = 'u8[4096]{0}', space=vmem, size = 0x1000, scoped, tag = 'input window, operand 0, single buffered']
    #allocation3 [shape = 's32[1]{0}', space=sflag, size = 0x4, scoped, tag = 'scoped memory for tpu_custom_call.1']
    #allocation4 [shape = 's32[1]{0}', space=sflag, size = 0x4, scoped, tag = 'scoped memory for tpu_custom_call.1']
    #allocation5 [shape = 'u8[8192]{0}', space=vmem, size = 0x2000, scoped, tag = 'input window, operand 1, single buffered']
    #allocation6 [shape = 's32[1]{0}', space=sflag, size = 0x4, scoped, tag = 'scoped memory for tpu_custom_call.1']
    #allocation7 [shape = 'u8[32768]{0}', space=vmem, size = 0x8000, scoped, tag = 'input window, operand 3, single buffered']
    #allocation8 [shape = 'u8[2048]{0}', space=vmem, size = 0x800, scoped, tag = 'output window, operand 0, single buffered']
    %10 = vsyncpa [#allocation3], 0
    %11 = vsyncpa [#allocation6], 0
    %12 = vsyncpa [#allocation4], 0
    // Predicated region
    $region2: #{tpu_custom_call.1} parent=1 // pred_check
      _
    $region3: #{tpu_custom_call.1} parent=1 // pred_check_branch
      %14 = sbr.rel (0) target = $region5
    $region4: #{tpu_custom_call.1} parent=1 // pred_region
      %s16 = ssub.s32 128, 128
      %17 = vsyncadd [#allocation3], %s16
      %s19 = sshll.u32 [#allocation2], 4
      %s20 = int_to_ptr.vmem [resolvable:$true] %s19
      %22 = dma.hbm_to_vmem [thread:$0]  %s0, 128, %s20, [#allocation3]
    $region5: #{tpu_custom_call.1} parent=1 // pred_fallthru
      _
    // Predicated region
    $region6: #{tpu_custom_call.1} parent=1 // pred_check
      _
    $region7: #{tpu_custom_call.1} parent=1 // pred_check_branch
      %24 = sbr.rel (0) target = $region9
    $region8: #{tpu_custom_call.1} parent=1 // pred_region
      %s26 = ssub.s32 256, 256
      %27 = vsyncadd [#allocation6], %s26
      %s28 = sshll.u32 [#allocation5], 4
      %s29 = int_to_ptr.vmem [resolvable:$true] %s28
      %34 = dma.hbm_to_vmem [thread:$0]  %s1, 256, %s29, [#allocation6], 64, 64, 4
    $region9: #{tpu_custom_call.1} parent=1 // pred_fallthru
      _
    // Predicated region
    $region10: #{tpu_custom_call.1} parent=1 // pred_check
      _
    $region11: #{tpu_custom_call.1} parent=1 // pred_check_branch
      %36 = sbr.rel (0) target = $region13
    $region12: #{tpu_custom_call.1} parent=1 // pred_region
      _
    $region13: #{tpu_custom_call.1} parent=1 // pred_fallthru
      _
    // Predicated region
    $region14: #{tpu_custom_call.1} parent=1 // pred_check
      _
    $region15: #{tpu_custom_call.1} parent=1 // pred_check_branch
      %38 = sbr.rel (0) target = $region17
    $region16: #{tpu_custom_call.1} parent=1 // pred_region
      %s40 = ssub.s32 1024, 1024
      %41 = vsyncadd [#allocation6], %s40
      %s42 = sshll.u32 [#allocation7], 4
      %s43 = int_to_ptr.vmem [resolvable:$true] %s42
      %48 = dma.hbm_to_vmem [thread:$0]  %s3, 1024, %s43, [#allocation6], 64, 64, 4
    $region17: #{tpu_custom_call.1} parent=1 // pred_fallthru
      _
    // Predicated region
    $region18: #{tpu_custom_call.1} parent=1 // pred_check
      _
    $region19: #{tpu_custom_call.1} parent=1 // pred_check_branch
      %50 = sbr.rel (0) target = $region21
    $region20: #{tpu_custom_call.1} parent=1 // pred_region
      _
    $region21: #{tpu_custom_call.1} parent=1 // pred_fallthru
      _
    // Predicated region
    $region22: #{tpu_custom_call.1} parent=1 // pred_check
      _
    $region23: #{tpu_custom_call.1} parent=1 // pred_check_branch
      %52 = sbr.rel (0) target = $region25
    $region24: #{tpu_custom_call.1} parent=1 // pred_region
      %53 = dma.done [#allocation3], 128
    $region25: #{tpu_custom_call.1} parent=1 // pred_fallthru
      _
    // Predicated region
    $region26: #{tpu_custom_call.1} parent=1 // pred_check
      _
    $region27: #{tpu_custom_call.1} parent=1 // pred_check_branch
      %55 = sbr.rel (0) target = $region29
    $region28: #{tpu_custom_call.1} parent=1 // pred_region
      %56 = dma.done [#allocation6], 256
    $region29: #{tpu_custom_call.1} parent=1 // pred_fallthru
      _
    // Predicated region
    $region30: #{tpu_custom_call.1} parent=1 // pred_check
      _
    $region31: #{tpu_custom_call.1} parent=1 // pred_check_branch
      %58 = sbr.rel (0) target = $region33
    $region32: #{tpu_custom_call.1} parent=1 // pred_region
      %59 = dma.done [#allocation6], 1024
    $region33: #{tpu_custom_call.1} parent=1 // pred_fallthru
      _
    %v61 = vld [vmem:[#allocation2] sm:$0xff]
    %v62 = vpack.c.bf16 %v61, %v61
    %v63 = vld [vmem:[#allocation5] sm:$0xf]
    %v64 = vld [vmem:[#allocation5 + $0x4] sm:$0xf]
    %v65 = vld [vmem:[#allocation5 + $0x8] sm:$0xf]
    %v66 = vld [vmem:[#allocation5 + $0xc] sm:$0xf]
    %v67 = vld [vmem:[%s2] sm:$0x1]
    %v69 = vlaneseq
    %v70 = vshrl.u32 %v69, 7
    %v71 = vsub.s32 0, %v70
    %v72 = vrot.slane %v67, %v71
    %v78 = vunpack.c.l.b16 %v63
    %v79 = vunpack.c.l.b16 %v64
    %v80 = vunpack.c.l.b16 %v65
    %v81 = vunpack.c.l.b16 %v66
    %v82 = vpack.c.b16 %v79, %v78
    %v83 = vpack.c.b16 %v81, %v80
    %vm86 = vcmask 261120
    %v88 = vsel %vm86, %v62, 0
    %90 = vmatprep.subr.bf16.mxu0 0
    %91 = vmatpush1.bf16.msra.mxu0 %v82
    %92 = vmatprep.subr.bf16.mxu0 0
    %93 = vmatpush1.bf16.msra.mxu0 %v83
    %94 = vmatprep.subr.bf16.mxu0 0
    %95 = vmatpush1.bf16.msra.mxu0 0
    %96 = vmatprep.subr.bf16.mxu0 0
    %97 = vmatpush1.bf16.msra.mxu0 0
    %98 = vmatprep.subr.bf16.mxu0 0
    %99 = vmatpush1.bf16.msra.mxu0 0
    %100 = vmatprep.subr.bf16.mxu0 0
    %101 = vmatpush1.bf16.msra.mxu0 0
    %102 = vmatprep.subr.bf16.mxu0 0
    %103 = vmatpush1.bf16.msra.mxu0 0
    %104 = vmatprep.subr.bf16.mxu0 0
    %105 = vmatpush1.bf16.msra.mxu0 0
    %106 = vmatprep.subr.bf16.mxu0 0
    %107 = vmatpush1.bf16.msra.mxu0 0
    %108 = vmatprep.subr.bf16.mxu0 0
    %109 = vmatpush1.bf16.msra.mxu0 0
    %110 = vmatprep.subr.bf16.mxu0 0
    %111 = vmatpush1.bf16.msra.mxu0 0
    %112 = vmatprep.subr.bf16.mxu0 0
    %113 = vmatpush1.bf16.msra.mxu0 0
    %114 = vmatprep.subr.bf16.mxu0 0
    %115 = vmatpush1.bf16.msra.mxu0 0
    %116 = vmatprep.subr.bf16.mxu0 0
    %117 = vmatpush1.bf16.msra.mxu0 0
    %118 = vmatprep.subr.bf16.mxu0 0
    %119 = vmatpush1.bf16.msra.mxu0 0
    %120 = vmatprep.subr.bf16.mxu0 0
    %121 = vmatpush1.bf16.msra.mxu0 0
    %122 = vmatprep.mubr.bf16.mxu0 0
    %123 = vmatmul.mubr.bf16.gmra.mrb[0].mxu0 %v88
    %v124 = vpop.f32.mrb[0].mxu0
    %v125 = vadd.f32 %v72, %v124
    %v126 = vpop.f32.mrb[0].mxu0
    %v127 = vpop.f32.mrb[0].mxu0
    %v128 = vpop.f32.mrb[0].mxu0
    %129 = vdwg.mxu0
    %v130 = vmax.f32 %v125, 0.0
    %v131 = vpack.c.bf16 %v130, %v130
    %v132 = vld [vmem:[#allocation7] sm:$0xf]
    %v133 = vld [vmem:[#allocation7 + $0x4] sm:$0xf]
    %v134 = vld [vmem:[#allocation7 + $0x8] sm:$0xf]
    %v135 = vld [vmem:[#allocation7 + $0xc] sm:$0xf]
    %v136 = vld [vmem:[#allocation7 + $0x10] sm:$0xf]
    %v137 = vld [vmem:[#allocation7 + $0x14] sm:$0xf]
    %v138 = vld [vmem:[#allocation7 + $0x18] sm:$0xf]
    %v139 = vld [vmem:[#allocation7 + $0x1c] sm:$0xf]
    %v140 = vld [vmem:[#allocation7 + $0x20] sm:$0xf]
    %v141 = vld [vmem:[#allocation7 + $0x24] sm:$0xf]
    %v142 = vld [vmem:[#allocation7 + $0x28] sm:$0xf]
    %v143 = vld [vmem:[#allocation7 + $0x2c] sm:$0xf]
    %v144 = vld [vmem:[#allocation7 + $0x30] sm:$0xf]
    %v145 = vld [vmem:[#allocation7 + $0x34] sm:$0xf]
    %v146 = vld [vmem:[#allocation7 + $0x38] sm:$0xf]
    %v147 = vld [vmem:[#allocation7 + $0x3c] sm:$0xf]
    %v148 = vld [vmem:[%s4] sm:$0x1]
    %v150 = vlaneseq
    %v151 = vshrl.u32 %v150, 7
    %v152 = vsub.s32 0, %v151
    %v153 = vrot.slane %v148, %v152
    %v171 = vunpack.c.l.b16 %v132
    %v172 = vunpack.c.l.b16 %v133
    %v173 = vunpack.c.l.b16 %v134
    %v174 = vunpack.c.l.b16 %v135
    %v175 = vunpack.c.l.b16 %v136
    %v176 = vunpack.c.l.b16 %v137
    %v177 = vunpack.c.l.b16 %v138
    %v178 = vunpack.c.l.b16 %v139
    %v179 = vunpack.c.l.b16 %v140
    %v180 = vunpack.c.l.b16 %v141
    %v181 = vunpack.c.l.b16 %v142
    %v182 = vunpack.c.l.b16 %v143
    %v183 = vunpack.c.l.b16 %v144
    %v184 = vunpack.c.l.b16 %v145
    %v185 = vunpack.c.l.b16 %v146
    %v186 = vunpack.c.l.b16 %v147
    %v187 = vpack.c.b16 %v172, %v171
    %v188 = vpack.c.b16 %v174, %v173
    %v189 = vpack.c.b16 %v176, %v175
    %v190 = vpack.c.b16 %v178, %v177
    %v191 = vpack.c.b16 %v180, %v179
    %v192 = vpack.c.b16 %v182, %v181
    %v193 = vpack.c.b16 %v184, %v183
    %v194 = vpack.c.b16 %v186, %v185
    %203 = vmatprep.subr.bf16.mxu0 0
    %204 = vmatpush1.bf16.msra.mxu0 %v187
    %205 = vmatprep.subr.bf16.mxu0 0
    %206 = vmatpush1.bf16.msra.mxu0 %v188
    %207 = vmatprep.subr.bf16.mxu0 0
    %208 = vmatpush1.bf16.msra.mxu0 %v189
    %209 = vmatprep.subr.bf16.mxu0 0
    %210 = vmatpush1.bf16.msra.mxu0 %v190
    %211 = vmatprep.subr.bf16.mxu0 0
    %212 = vmatpush1.bf16.msra.mxu0 %v191
    %213 = vmatprep.subr.bf16.mxu0 0
    %214 = vmatpush1.bf16.msra.mxu0 %v192
    %215 = vmatprep.subr.bf16.mxu0 0
    %216 = vmatpush1.bf16.msra.mxu0 %v193
    %217 = vmatprep.subr.bf16.mxu0 0
    %218 = vmatpush1.bf16.msra.mxu0 %v194
    %219 = vmatprep.subr.bf16.mxu0 0
    %220 = vmatpush1.bf16.msra.mxu0 0
    %221 = vmatprep.subr.bf16.mxu0 0
    %222 = vmatpush1.bf16.msra.mxu0 0
    %223 = vmatprep.subr.bf16.mxu0 0
    %224 = vmatpush1.bf16.msra.mxu0 0
    %225 = vmatprep.subr.bf16.mxu0 0
    %226 = vmatpush1.bf16.msra.mxu0 0
    %227 = vmatprep.subr.bf16.mxu0 0
    %228 = vmatpush1.bf16.msra.mxu0 0
    %229 = vmatprep.subr.bf16.mxu0 0
    %230 = vmatpush1.bf16.msra.mxu0 0
    %231 = vmatprep.subr.bf16.mxu0 0
    %232 = vmatpush1.bf16.msra.mxu0 0
    %233 = vmatprep.subr.bf16.mxu0 0
    %234 = vmatpush1.bf16.msra.mxu0 0
    %235 = vmatprep.mubr.bf16.mxu0 0
    %236 = vmatmul.mubr.bf16.gmra.mrb[0].mxu0 %v131
    %v237 = vpop.f32.mrb[0].mxu0
    %v238 = vadd.f32 %v153, %v237
    %v239 = vpop.f32.mrb[0].mxu0
    %v240 = vpop.f32.mrb[0].mxu0
    %v241 = vpop.f32.mrb[0].mxu0
    %242 = vdwg.mxu0
    %243 = vmax.xlane.f32.xlu0 %v238
    %v244 = vpop.xlane.xlu0 %243
    %v245 = vsub.f32 %v238, %v244
    %v246 = vmul.f32 %v245, 1.442695
    %v247 = vpow.pop %v246
    %248 = vadd.xlane.f32.xlu0 %v247
    %v249 = vpop.xlane.xlu0 %248
    %v250 = vlog2.pop %v249
    %v251 = vmul.f32 %v250, 0.6931472
    %v252 = vsub.f32 %v245, %v251
    %v253 = vpack.c.bf16 %v252, %v252
    %254 = vst [vmem:[#allocation8] sm:$0xf] %v253
    // Predicated region
    $region34: #{tpu_custom_call.1} parent=1 // pred_check
      _
    $region35: #{tpu_custom_call.1} parent=1 // pred_check_branch
      %256 = sbr.rel (0) target = $region37
    $region36: #{tpu_custom_call.1} parent=1 // pred_region
      %s258 = ssub.s32 64, 64
      %259 = vsyncadd [#allocation4], %s258
      %s261 = sshll.u32 [#allocation8], 4
      %s262 = int_to_ptr.vmem [resolvable:$true] %s261
      %264 = dma.vmem_to_hbm [thread:$0]  %s262, 64, %s5, [#allocation4]
    $region37: #{tpu_custom_call.1} parent=1 // pred_fallthru
      _
    // Predicated region
    $region38: #{tpu_custom_call.1} parent=1 // pred_check
      _
    $region39: #{tpu_custom_call.1} parent=1 // pred_check_branch
      %266 = sbr.rel (0) target = $region41
    $region40: #{tpu_custom_call.1} parent=1 // pred_region
      %267 = dma.done [#allocation4], 64
    $region41: #{tpu_custom_call.1} parent=1 // pred_fallthru
      _
    %268 = vsyncpa [#allocation3], 1
    %269 = vsyncpa [#allocation6], 1
    %270 = vsyncpa [#allocation4], 1

</llo_original>
